<compile_context>
chip_gen: v6e
topology: v6e:2x2x1
jax: 0.10.0
libtpu: 0.0.40
codegen_flags: <defaults>
</compile_context>

<pallas_src>
import math

import jax
import jax.numpy as jnp
from jax.experimental import pallas as pl
from jax.experimental.pallas import tpu as pltpu

BN_EPS = 1e-5
IN_SIZE = 512
OUT_SIZE = 128
FRAMES = 128
FEATS = 5
_HIDDEN = (128, 64, 32, 64, 128)          # true widths of the 5 FC_blocks
_PADDED_IN = (IN_SIZE, 128, 128, 128, 128, 128)   # layer input widths after zero-padding


def idnn_kernel(x_ref, y_ref, b_ref, w1_ref, w2_ref, w3_ref, w4_ref, w5_ref, w6_ref,
                out_ref):
    """Full IDNN forward for one batch tile. BN folded into W/b, bf16 matmuls, f32 epilogue."""
    bias = b_ref[...]                                        # [8,128] f32, loaded once
    h = x_ref[...]                                           # bf16 [TM, 512]
    w_refs = (w1_ref, w2_ref, w3_ref, w4_ref, w5_ref)
    for i, w_ref in enumerate(w_refs):
        z = jnp.dot(h, w_ref[...], preferred_element_type=jnp.float32)   # [TM,128] f32 accum
        z = z + bias[i:i + 1, :]                             # folded (Linear+BN) bias
        z = jnp.maximum(z, 0.0)                              # ReLU (padded cols stay exactly 0)
        h = z.astype(jnp.bfloat16)                           # back to bf16 for next MXU pass
    y_hat = jnp.dot(h, w6_ref[...], preferred_element_type=jnp.float32)
    y_hat = y_hat + bias[5:6, :]
    diff = y_hat - y_ref[...]
    out_ref[...] = diff * diff                               # F.mse_loss(..., reduction='none')


def make_params(key, in_size=IN_SIZE, out_size=OUT_SIZE):
    """Deterministic init matching IDNN.__init__ shapes (PyTorch-style uniform init)."""
    dims = [in_size] + list(_HIDDEN)
    params = []
    keys = jax.random.split(key, 12)
    ki = 0
    for i in range(5):
        fan_in, fan_out = dims[i], dims[i + 1]
        bound = 1.0 / math.sqrt(fan_in)
        w = jax.random.uniform(keys[ki], (fan_in, fan_out), jnp.float32, -bound, bound); ki += 1
        b = jax.random.uniform(keys[ki], (fan_out,), jnp.float32, -bound, bound); ki += 1
        gamma = jnp.ones((fan_out,), jnp.float32)
        beta = jnp.zeros((fan_out,), jnp.float32)
        running_mean = jnp.zeros((fan_out,), jnp.float32)
        running_var = jnp.ones((fan_out,), jnp.float32)
        params.append((w, b, gamma, beta, running_mean, running_var))
    bound = 1.0 / math.sqrt(float(_HIDDEN[-1]))
    w6 = jax.random.uniform(keys[10], (_HIDDEN[-1], out_size), jnp.float32, -bound, bound)
    b6 = jax.random.uniform(keys[11], (out_size,), jnp.float32, -bound, bound)
    params.append((w6, b6))
    return params


def prepare_kernel_params(params):
    """Fold eval-mode BN into W/b, zero-pad all layer widths to 128, cast weights to bf16,
    pack the 6 bias rows into one [8,128] f32 tile (padded lanes stay 0 => padded activations
    stay exactly 0 through bias+ReLU)."""
    folded = []
    for (w, b, gamma, beta, mean, var) in params[:5]:
        scale = gamma / jnp.sqrt(var + BN_EPS)               # [out]
        folded.append((w * scale[None, :], b * scale + (beta - mean * scale)))
    folded.append(params[5])

    weights = []
    bias_packed = jnp.zeros((8, 128), jnp.float32)           # one (8,128) f32 tile
    for i, (w, b) in enumerate(folded):
        fan_in, fan_out = w.shape
        wp = jnp.pad(w, ((0, _PADDED_IN[i] - fan_in), (0, 128 - fan_out)))
        weights.append(wp.astype(jnp.bfloat16))
        bias_packed = bias_packed.at[i, :fan_out].set(b)
    return weights, bias_packed


def _round_up(n, m):
    return -(-n // m) * m


def _choose_tile(B):
    """Batch tile: multiple of 16 (bf16 packing); for large batches a multiple of 256
    capped at 1024, always leaving >= 2 tiles so v7x's second TensorCore gets work."""
    bt = _round_up(B, 16)
    if bt < 256:
        return bt                                            # single small tile
    tm = (bt // 2 // 256) * 256
    return max(128, min(1024, tm))


def idnn_forward(X, section_label, weights, bias_packed):
    # section_label is accepted but unused, exactly like the reference forward.
    del section_label
    B = X.shape[0]

    # Feature-select glue (pure JAX): x = concat(feats {0,1,3,4}) flattened, y = feat 2.
    # Cast to bf16 *before* the concat so this fusion writes bf16 (half the HBM bytes).
    Xb = X.astype(jnp.bfloat16)
    x = jnp.concatenate([Xb[:, :, 0:2], Xb[:, :, 3:5]], axis=2).reshape(B, 4 * FRAMES)
    y = X[:, :, 2].astype(jnp.float32)                       # [B, 128], kept f32 for MSE

    tm = _choose_tile(B)
    b_pad = _round_up(B, tm)
    if b_pad != B:
        x = jnp.pad(x, ((0, b_pad - B), (0, 0)))
        y = jnp.pad(y, ((0, b_pad - B), (0, 0)))

    grid = (b_pad // tm,)

    def act_spec(cols):
        return pl.BlockSpec((tm, cols), lambda i: (i, 0))

    def const_spec(shape):
        return pl.BlockSpec(shape, lambda i: (0, 0))         # VMEM-resident across batch tiles

    padded_dims = _PADDED_IN + (OUT_SIZE,)
    flops = 2 * b_pad * sum(a * b for a, b in zip(padded_dims[:-1], padded_dims[1:]))
    bytes_accessed = (x.size * 2 + y.size * 4 + bias_packed.size * 4
                      + sum(w.size * 2 for w in weights) + b_pad * OUT_SIZE * 4)

    out = pl.pallas_call(
        idnn_kernel,
        grid=grid,
        in_specs=[act_spec(IN_SIZE), act_spec(OUT_SIZE), const_spec((8, 128))]
                 + [const_spec(w.shape) for w in weights],
        out_specs=act_spec(OUT_SIZE),
        out_shape=jax.ShapeDtypeStruct((b_pad, OUT_SIZE), jnp.float32),
        compiler_params=pltpu.CompilerParams(
            dimension_semantics=("parallel",),               # dual-TC sharding on v7x
            vmem_limit_bytes=32 * 1024 * 1024),              # explicit: v5e default is 16 MiB
        cost_estimate=pl.CostEstimate(
            flops=flops, transcendentals=0, bytes_accessed=bytes_accessed),
    )(x, y, bias_packed, *weights)
    return out[:B]


def _reference_forward(X, params):
    """Pure-JAX f32 reference of the PyTorch forward (BN in eval mode with initial stats)."""
    B = X.shape[0]
    x = jnp.concatenate([X[:, :, 0:2], X[:, :, 3:5]], axis=2).reshape(B, -1)
    y = X[:, :, 2]
    for (w, b, gamma, beta, mean, var) in params[:5]:
        x = x @ w + b
        x = (x - mean) / jnp.sqrt(var + BN_EPS) * gamma + beta
        x = jnp.maximum(x, 0.0)
    w6, b6 = params[5]
    y_hat = x @ w6 + b6
    d = y_hat - y
    return d * d


if __name__ == "__main__":
    key = jax.random.PRNGKey(0)
    kx, kp, ks = jax.random.split(key, 3)

    B = 8
    X = jax.random.normal(kx, (B, FRAMES, FEATS), jnp.float32)       # [8, 128, 5]
    section_label = jax.random.randint(ks, (B,), 0, 6)               # unused by forward
    params = make_params(kp)
    weights, bias_packed = prepare_kernel_params(params)

    anomaly_score = idnn_forward(X, section_label, weights, bias_packed)
    jax.block_until_ready(anomaly_score)

    ref = _reference_forward(X, params)

    assert anomaly_score.shape == (B, OUT_SIZE)
    assert anomaly_score.dtype == jnp.float32
    assert bool(jnp.all(jnp.isfinite(anomaly_score)))
    # bf16 MXU path vs f32 reference: loose tolerance.
    assert bool(jnp.allclose(anomaly_score, ref, rtol=0.1, atol=0.1))
    print("KERNEL_OK")
</pallas_src>

<mosaic_0001>
module attributes {stable_mosaic.version = 11 : i64} {
  func.func @idnn_kernel(%arg0: i32, %arg1: memref<16x512xbf16, #tpu.memory_space<vmem>>, %arg2: memref<16x128xf32, #tpu.memory_space<vmem>>, %arg3: memref<8x128xf32, #tpu.memory_space<vmem>>, %arg4: memref<512x128xbf16, #tpu.memory_space<vmem>>, %arg5: memref<128x128xbf16, #tpu.memory_space<vmem>>, %arg6: memref<128x128xbf16, #tpu.memory_space<vmem>>, %arg7: memref<128x128xbf16, #tpu.memory_space<vmem>>, %arg8: memref<128x128xbf16, #tpu.memory_space<vmem>>, %arg9: memref<128x128xbf16, #tpu.memory_space<vmem>>, %arg10: memref<16x128xf32, #tpu.memory_space<vmem>>) attributes {dimension_semantics = [#tpu.dimension_semantics<parallel>], iteration_bounds = array<i64: 1>, scalar_prefetch = 0 : i64, scratch_operands = 0 : i64, tpu.core_type = #tpu.core_type<tc>, window_params = [{transform_indices = @transform_0, window_bounds = array<i64: 16, 512>}, {transform_indices = @transform_1, window_bounds = array<i64: 16, 128>}, {pipeline_mode = #tpu.pipeline_mode<synchronous>, transform_indices = @transform_2, window_bounds = array<i64: 8, 128>}, {pipeline_mode = #tpu.pipeline_mode<synchronous>, transform_indices = @transform_3, window_bounds = array<i64: 512, 128>}, {pipeline_mode = #tpu.pipeline_mode<synchronous>, transform_indices = @transform_4, window_bounds = array<i64: 128, 128>}, {pipeline_mode = #tpu.pipeline_mode<synchronous>, transform_indices = @transform_5, window_bounds = array<i64: 128, 128>}, {pipeline_mode = #tpu.pipeline_mode<synchronous>, transform_indices = @transform_6, window_bounds = array<i64: 128, 128>}, {pipeline_mode = #tpu.pipeline_mode<synchronous>, transform_indices = @transform_7, window_bounds = array<i64: 128, 128>}, {pipeline_mode = #tpu.pipeline_mode<synchronous>, transform_indices = @transform_8, window_bounds = array<i64: 128, 128>}, {transform_indices = @transform_9, window_bounds = array<i64: 16, 128>}]} {
    %c0 = arith.constant 0 : index
    %c0_0 = arith.constant 0 : index
    %0 = vector.load %arg3[%c0, %c0_0] : memref<8x128xf32, #tpu.memory_space<vmem>>, vector<8x128xf32>
    %c0_1 = arith.constant 0 : index
    %c0_2 = arith.constant 0 : index
    %1 = vector.load %arg1[%c0_1, %c0_2] : memref<16x512xbf16, #tpu.memory_space<vmem>>, vector<16x512xbf16>
    %c0_3 = arith.constant 0 : index
    %c0_4 = arith.constant 0 : index
    %2 = vector.load %arg4[%c0_3, %c0_4] : memref<512x128xbf16, #tpu.memory_space<vmem>>, vector<512x128xbf16>
    %cst = arith.constant dense<0.000000e+00> : vector<16x128xf32>
    %3 = tpu.matmul %1, %2, %cst {dimension_numbers = #tpu.dot_dimension_numbers<[1], [0], [0], [1], [0, 0, 1, 1], [], []>} : vector<16x512xbf16>, vector<512x128xbf16>, vector<16x128xf32> -> vector<16x128xf32>
    %4 = vector.extract_strided_slice %0 {offsets = [0, 0], sizes = [1, 128], strides = [1, 1]} : vector<8x128xf32> to vector<1x128xf32>
    %5 = vector.broadcast %4 : vector<1x128xf32> to vector<16x128xf32>
    %6 = arith.addf %3, %5 : vector<16x128xf32>
    %cst_5 = arith.constant 0.000000e+00 : f32
    %7 = vector.broadcast %cst_5 : f32 to vector<16x128xf32>
    %8 = arith.maximumf %6, %7 : vector<16x128xf32>
    %9 = arith.truncf %8 : vector<16x128xf32> to vector<16x128xbf16>
    %c0_6 = arith.constant 0 : index
    %c0_7 = arith.constant 0 : index
    %10 = vector.load %arg5[%c0_6, %c0_7] : memref<128x128xbf16, #tpu.memory_space<vmem>>, vector<128x128xbf16>
    %cst_8 = arith.constant dense<0.000000e+00> : vector<16x128xf32>
    %11 = tpu.matmul %9, %10, %cst_8 {dimension_numbers = #tpu.dot_dimension_numbers<[1], [0], [0], [1], [0, 0, 1, 1], [], []>} : vector<16x128xbf16>, vector<128x128xbf16>, vector<16x128xf32> -> vector<16x128xf32>
    %12 = vector.extract_strided_slice %0 {offsets = [1, 0], sizes = [1, 128], strides = [1, 1]} : vector<8x128xf32> to vector<1x128xf32>
    %13 = vector.broadcast %12 : vector<1x128xf32> to vector<16x128xf32>
    %14 = arith.addf %11, %13 : vector<16x128xf32>
    %cst_9 = arith.constant 0.000000e+00 : f32
    %15 = vector.broadcast %cst_9 : f32 to vector<16x128xf32>
    %16 = arith.maximumf %14, %15 : vector<16x128xf32>
    %17 = arith.truncf %16 : vector<16x128xf32> to vector<16x128xbf16>
    %c0_10 = arith.constant 0 : index
    %c0_11 = arith.constant 0 : index
    %18 = vector.load %arg6[%c0_10, %c0_11] : memref<128x128xbf16, #tpu.memory_space<vmem>>, vector<128x128xbf16>
    %cst_12 = arith.constant dense<0.000000e+00> : vector<16x128xf32>
    %19 = tpu.matmul %17, %18, %cst_12 {dimension_numbers = #tpu.dot_dimension_numbers<[1], [0], [0], [1], [0, 0, 1, 1], [], []>} : vector<16x128xbf16>, vector<128x128xbf16>, vector<16x128xf32> -> vector<16x128xf32>
    %20 = vector.extract_strided_slice %0 {offsets = [2, 0], sizes = [1, 128], strides = [1, 1]} : vector<8x128xf32> to vector<1x128xf32>
    %21 = vector.broadcast %20 : vector<1x128xf32> to vector<16x128xf32>
    %22 = arith.addf %19, %21 : vector<16x128xf32>
    %cst_13 = arith.constant 0.000000e+00 : f32
    %23 = vector.broadcast %cst_13 : f32 to vector<16x128xf32>
    %24 = arith.maximumf %22, %23 : vector<16x128xf32>
    %25 = arith.truncf %24 : vector<16x128xf32> to vector<16x128xbf16>
    %c0_14 = arith.constant 0 : index
    %c0_15 = arith.constant 0 : index
    %26 = vector.load %arg7[%c0_14, %c0_15] : memref<128x128xbf16, #tpu.memory_space<vmem>>, vector<128x128xbf16>
    %cst_16 = arith.constant dense<0.000000e+00> : vector<16x128xf32>
    %27 = tpu.matmul %25, %26, %cst_16 {dimension_numbers = #tpu.dot_dimension_numbers<[1], [0], [0], [1], [0, 0, 1, 1], [], []>} : vector<16x128xbf16>, vector<128x128xbf16>, vector<16x128xf32> -> vector<16x128xf32>
    %28 = vector.extract_strided_slice %0 {offsets = [3, 0], sizes = [1, 128], strides = [1, 1]} : vector<8x128xf32> to vector<1x128xf32>
    %29 = vector.broadcast %28 : vector<1x128xf32> to vector<16x128xf32>
    %30 = arith.addf %27, %29 : vector<16x128xf32>
    %cst_17 = arith.constant 0.000000e+00 : f32
    %31 = vector.broadcast %cst_17 : f32 to vector<16x128xf32>
    %32 = arith.maximumf %30, %31 : vector<16x128xf32>
    %33 = arith.truncf %32 : vector<16x128xf32> to vector<16x128xbf16>
    %c0_18 = arith.constant 0 : index
    %c0_19 = arith.constant 0 : index
    %34 = vector.load %arg8[%c0_18, %c0_19] : memref<128x128xbf16, #tpu.memory_space<vmem>>, vector<128x128xbf16>
    %cst_20 = arith.constant dense<0.000000e+00> : vector<16x128xf32>
    %35 = tpu.matmul %33, %34, %cst_20 {dimension_numbers = #tpu.dot_dimension_numbers<[1], [0], [0], [1], [0, 0, 1, 1], [], []>} : vector<16x128xbf16>, vector<128x128xbf16>, vector<16x128xf32> -> vector<16x128xf32>
    %36 = vector.extract_strided_slice %0 {offsets = [4, 0], sizes = [1, 128], strides = [1, 1]} : vector<8x128xf32> to vector<1x128xf32>
    %37 = vector.broadcast %36 : vector<1x128xf32> to vector<16x128xf32>
    %38 = arith.addf %35, %37 : vector<16x128xf32>
    %cst_21 = arith.constant 0.000000e+00 : f32
    %39 = vector.broadcast %cst_21 : f32 to vector<16x128xf32>
    %40 = arith.maximumf %38, %39 : vector<16x128xf32>
    %41 = arith.truncf %40 : vector<16x128xf32> to vector<16x128xbf16>
    %c0_22 = arith.constant 0 : index
    %c0_23 = arith.constant 0 : index
    %42 = vector.load %arg9[%c0_22, %c0_23] : memref<128x128xbf16, #tpu.memory_space<vmem>>, vector<128x128xbf16>
    %cst_24 = arith.constant dense<0.000000e+00> : vector<16x128xf32>
    %43 = tpu.matmul %41, %42, %cst_24 {dimension_numbers = #tpu.dot_dimension_numbers<[1], [0], [0], [1], [0, 0, 1, 1], [], []>} : vector<16x128xbf16>, vector<128x128xbf16>, vector<16x128xf32> -> vector<16x128xf32>
    %44 = vector.extract_strided_slice %0 {offsets = [5, 0], sizes = [1, 128], strides = [1, 1]} : vector<8x128xf32> to vector<1x128xf32>
    %45 = vector.broadcast %44 : vector<1x128xf32> to vector<16x128xf32>
    %46 = arith.addf %43, %45 : vector<16x128xf32>
    %c0_25 = arith.constant 0 : index
    %c0_26 = arith.constant 0 : index
    %47 = vector.load %arg2[%c0_25, %c0_26] : memref<16x128xf32, #tpu.memory_space<vmem>>, vector<16x128xf32>
    %48 = arith.subf %46, %47 : vector<16x128xf32>
    %49 = arith.mulf %48, %48 : vector<16x128xf32>
    %c0_27 = arith.constant 0 : index
    %c0_28 = arith.constant 0 : index
    %50 = vector.load %arg10[%c0_27, %c0_28] : memref<16x128xf32, #tpu.memory_space<vmem>>, vector<16x128xf32>
    tpu.vector_store %arg10[%c0_27, %c0_28], %49 {strides = array<i32>} : memref<16x128xf32, #tpu.memory_space<vmem>>, vector<16x128xf32>,
    return
  }
  func.func @transform_0(%arg0: i32) -> (i32, i32) {
    %c0_i32 = arith.constant 0 : i32
    %c0_i32_0 = arith.constant 0 : i32
    return %arg0, %c0_i32 : i32, i32
  }
  func.func @transform_1(%arg0: i32) -> (i32, i32) {
    %c0_i32 = arith.constant 0 : i32
    %c0_i32_0 = arith.constant 0 : i32
    return %arg0, %c0_i32 : i32, i32
  }
  func.func @transform_2(%arg0: i32) -> (i32, i32) {
    %c0_i32 = arith.constant 0 : i32
    %c0_i32_0 = arith.constant 0 : i32
    %c0_i32_1 = arith.constant 0 : i32
    return %c0_i32, %c0_i32_0 : i32, i32
  }
  func.func @transform_3(%arg0: i32) -> (i32, i32) {
    %c0_i32 = arith.constant 0 : i32
    %c0_i32_0 = arith.constant 0 : i32
    %c0_i32_1 = arith.constant 0 : i32
    return %c0_i32, %c0_i32_0 : i32, i32
  }
  func.func @transform_4(%arg0: i32) -> (i32, i32) {
    %c0_i32 = arith.constant 0 : i32
    %c0_i32_0 = arith.constant 0 : i32
    %c0_i32_1 = arith.constant 0 : i32
    return %c0_i32, %c0_i32_0 : i32, i32
  }
  func.func @transform_5(%arg0: i32) -> (i32, i32) {
    %c0_i32 = arith.constant 0 : i32
    %c0_i32_0 = arith.constant 0 : i32
    %c0_i32_1 = arith.constant 0 : i32
    return %c0_i32, %c0_i32_0 : i32, i32
  }
  func.func @transform_6(%arg0: i32) -> (i32, i32) {
    %c0_i32 = arith.constant 0 : i32
    %c0_i32_0 = arith.constant 0 : i32
    %c0_i32_1 = arith.constant 0 : i32
    return %c0_i32, %c0_i32_0 : i32, i32
  }
  func.func @transform_7(%arg0: i32) -> (i32, i32) {
    %c0_i32 = arith.constant 0 : i32
    %c0_i32_0 = arith.constant 0 : i32
    %c0_i32_1 = arith.constant 0 : i32
    return %c0_i32, %c0_i32_0 : i32, i32
  }
  func.func @transform_8(%arg0: i32) -> (i32, i32) {
    %c0_i32 = arith.constant 0 : i32
    %c0_i32_0 = arith.constant 0 : i32
    %c0_i32_1 = arith.constant 0 : i32
    return %c0_i32, %c0_i32_0 : i32, i32
  }
  func.func @transform_9(%arg0: i32) -> (i32, i32) {
    %c0_i32 = arith.constant 0 : i32
    %c0_i32_0 = arith.constant 0 : i32
    return %arg0, %c0_i32 : i32, i32
  }
}

</mosaic_0001>

<llo_original>
// kernel: tpu_custom_call.1
$region0: #{tpu_custom_call.1}
  #allocation0 [shape = 'u32[]', space=smem, size = 0x4, offset = 0x4, fixed_abs, tag = 'smem constant byte address 0x4 - core index']
  #allocation1 [shape = 'u32[144,128]{1,0:T(1,128)}', space=vmem, size = 0x12000, scoped, tag = 'internal scratch']
  %s0 = inlined_call_operand.hbm [shape: bf16[16,512], index: 0, kind: input, shape index: {}]
  %s1 = inlined_call_operand.hbm [shape: f32[16,128], index: 1, kind: input, shape index: {}]
  %s2 = inlined_call_operand.hbm [shape: f32[8,128], index: 2, kind: input, shape index: {}]
  %s3 = inlined_call_operand.hbm [shape: bf16[512,128], index: 3, kind: input, shape index: {}]
  %s4 = inlined_call_operand.hbm [shape: bf16[128,128], index: 4, kind: input, shape index: {}]
  %s5 = inlined_call_operand.hbm [shape: bf16[128,128], index: 5, kind: input, shape index: {}]
  %s6 = inlined_call_operand.hbm [shape: bf16[128,128], index: 6, kind: input, shape index: {}]
  %s7 = inlined_call_operand.hbm [shape: bf16[128,128], index: 7, kind: input, shape index: {}]
  %s8 = inlined_call_operand.hbm [shape: bf16[128,128], index: 8, kind: input, shape index: {}]
  %s9 = inlined_call_operand.hbm [shape: f32[16,128], index: 9, kind: output, shape index: {}]
  %s10 = sld [smem:[#allocation0]]
  $region82: #{tpu_custom_call.1} parent=0
    _
  %s12 = ssub.s32 1, %s10
  %s13 = scalar_select 0, %s12, %s10
  $region1: #{tpu_custom_call.1} parent=0
    #allocation2 [shape = 'u8[16384]{0}', space=vmem, size = 0x4000, scoped, tag = 'input window, operand 0, single buffered']
    #allocation3 [shape = 's32[1]{0}', space=sflag, size = 0x4, scoped, tag = 'scoped memory for tpu_custom_call.1']
    #allocation4 [shape = 's32[1]{0}', space=sflag, size = 0x4, scoped, tag = 'scoped memory for tpu_custom_call.1']
    #allocation5 [shape = 'u8[8192]{0}', space=vmem, size = 0x2000, scoped, tag = 'input window, operand 1, single buffered']
    #allocation6 [shape = 's32[1]{0}', space=sflag, size = 0x4, scoped, tag = 'scoped memory for tpu_custom_call.1']
    #allocation7 [shape = 'u8[4096]{0}', space=vmem, size = 0x1000, scoped, tag = 'input window, operand 2, single buffered']
    #allocation8 [shape = 'u8[131072]{0}', space=vmem, size = 0x20000, scoped, tag = 'input window, operand 3, single buffered']
    #allocation9 [shape = 's32[1]{0}', space=sflag, size = 0x4, scoped, tag = 'scoped memory for tpu_custom_call.1']
    #allocation10 [shape = 'u8[32768]{0}', space=vmem, size = 0x8000, scoped, tag = 'input window, operand 4, single buffered']
    #allocation11 [shape = 'u8[32768]{0}', space=vmem, size = 0x8000, scoped, tag = 'input window, operand 5, single buffered']
    #allocation12 [shape = 's32[1]{0}', space=sflag, size = 0x4, scoped, tag = 'scoped memory for tpu_custom_call.1']
    #allocation13 [shape = 'u8[32768]{0}', space=vmem, size = 0x8000, scoped, tag = 'input window, operand 6, single buffered']
    #allocation14 [shape = 'u8[32768]{0}', space=vmem, size = 0x8000, scoped, tag = 'input window, operand 7, single buffered']
    #allocation15 [shape = 's32[1]{0}', space=sflag, size = 0x4, scoped, tag = 'scoped memory for tpu_custom_call.1']
    #allocation16 [shape = 'u8[32768]{0}', space=vmem, size = 0x8000, scoped, tag = 'input window, operand 8, single buffered']
    #allocation17 [shape = 'u8[8192]{0}', space=vmem, size = 0x2000, scoped, tag = 'output window, operand 0, single buffered']
    %14 = vsyncpa [#allocation3], 0
    %15 = vsyncpa [#allocation6], 0
    %16 = vsyncpa [#allocation9], 0
    %17 = vsyncpa [#allocation12], 0
    %18 = vsyncpa [#allocation15], 0
    %19 = vsyncpa [#allocation4], 0
    // Predicated region
    $region2: #{tpu_custom_call.1} parent=1 // pred_check
      _
    $region3: #{tpu_custom_call.1} parent=1 // pred_check_branch
      %21 = sbr.rel (0) target = $region5
    $region4: #{tpu_custom_call.1} parent=1 // pred_region
      %s23 = ssub.s32 512, 512
      %24 = vsyncadd [#allocation3], %s23
      %s25 = sshll.u32 [#allocation2], 4
      %s26 = int_to_ptr.vmem [resolvable:$true] %s25
      %31 = dma.hbm_to_vmem [thread:$0]  %s0, 512, %s26, [#allocation3], 256, 256, 16
    $region5: #{tpu_custom_call.1} parent=1 // pred_fallthru
      _
    // Predicated region
    $region6: #{tpu_custom_call.1} parent=1 // pred_check
      _
    $region7: #{tpu_custom_call.1} parent=1 // pred_check_branch
      %33 = sbr.rel (0) target = $region9
    $region8: #{tpu_custom_call.1} parent=1 // pred_region
      %s35 = ssub.s32 256, 256
      %36 = vsyncadd [#allocation6], %s35
      %s37 = sshll.u32 [#allocation5], 4
      %s38 = int_to_ptr.vmem [resolvable:$true] %s37
      %43 = dma.hbm_to_vmem [thread:$0]  %s1, 256, %s38, [#allocation6], 128, 128, 8
    $region9: #{tpu_custom_call.1} parent=1 // pred_fallthru
      _
    // Predicated region
    $region10: #{tpu_custom_call.1} parent=1 // pred_check
      _
    $region11: #{tpu_custom_call.1} parent=1 // pred_check_branch
      %45 = sbr.rel (0) target = $region13
    $region12: #{tpu_custom_call.1} parent=1 // pred_region
      %s47 = ssub.s32 128, 128
      %48 = vsyncadd [#allocation6], %s47
      %s50 = sshll.u32 [#allocation7], 4
      %s51 = int_to_ptr.vmem [resolvable:$true] %s50
      %53 = dma.hbm_to_vmem [thread:$0]  %s2, 128, %s51, [#allocation6]
    $region13: #{tpu_custom_call.1} parent=1 // pred_fallthru
      _
    // Predicated region
    $region14: #{tpu_custom_call.1} parent=1 // pred_check
      _
    $region15: #{tpu_custom_call.1} parent=1 // pred_check_branch
      %55 = sbr.rel (0) target = $region17
    $region16: #{tpu_custom_call.1} parent=1 // pred_region
      %s57 = ssub.s32 4096, 4096
      %58 = vsyncadd [#allocation9], %s57
      %s59 = sshll.u32 [#allocation8], 4
      %s60 = int_to_ptr.vmem [resolvable:$true] %s59
      %65 = dma.hbm_to_vmem [thread:$0]  %s3, 4096, %s60, [#allocation9], 64, 64, 4
    $region17: #{tpu_custom_call.1} parent=1 // pred_fallthru
      _
    // Predicated region
    $region18: #{tpu_custom_call.1} parent=1 // pred_check
      _
    $region19: #{tpu_custom_call.1} parent=1 // pred_check_branch
      %67 = sbr.rel (0) target = $region21
    $region20: #{tpu_custom_call.1} parent=1 // pred_region
      %s69 = ssub.s32 1024, 1024
      %70 = vsyncadd [#allocation9], %s69
      %s71 = sshll.u32 [#allocation10], 4
      %s72 = int_to_ptr.vmem [resolvable:$true] %s71
      %77 = dma.hbm_to_vmem [thread:$0]  %s4, 1024, %s72, [#allocation9], 64, 64, 4
    $region21: #{tpu_custom_call.1} parent=1 // pred_fallthru
      _
    // Predicated region
    $region22: #{tpu_custom_call.1} parent=1 // pred_check
      _
    $region23: #{tpu_custom_call.1} parent=1 // pred_check_branch
      %79 = sbr.rel (0) target = $region25
    $region24: #{tpu_custom_call.1} parent=1 // pred_region
      %s81 = ssub.s32 1024, 1024
      %82 = vsyncadd [#allocation12], %s81
      %s83 = sshll.u32 [#allocation11], 4
      %s84 = int_to_ptr.vmem [resolvable:$true] %s83
      %89 = dma.hbm_to_vmem [thread:$0]  %s5, 1024, %s84, [#allocation12], 64, 64, 4
    $region25: #{tpu_custom_call.1} parent=1 // pred_fallthru
      _
    // Predicated region
    $region26: #{tpu_custom_call.1} parent=1 // pred_check
      _
    $region27: #{tpu_custom_call.1} parent=1 // pred_check_branch
      %91 = sbr.rel (0) target = $region29
    $region28: #{tpu_custom_call.1} parent=1 // pred_region
      %s93 = ssub.s32 1024, 1024
      %94 = vsyncadd [#allocation12], %s93
      %s95 = sshll.u32 [#allocation13], 4
      %s96 = int_to_ptr.vmem [resolvable:$true] %s95
      %101 = dma.hbm_to_vmem [thread:$0]  %s6, 1024, %s96, [#allocation12], 64, 64, 4
    $region29: #{tpu_custom_call.1} parent=1 // pred_fallthru
      _
    // Predicated region
    $region30: #{tpu_custom_call.1} parent=1 // pred_check
      _
    $region31: #{tpu_custom_call.1} parent=1 // pred_check_branch
      %103 = sbr.rel (0) target = $region33
    $region32: #{tpu_custom_call.1} parent=1 // pred_region
      %s105 = ssub.s32 1024, 1024
      %106 = vsyncadd [#allocation15], %s105
      %s107 = sshll.u32 [#allocation14], 4
      %s108 = int_to_ptr.vmem [resolvable:$true] %s107
      %113 = dma.hbm_to_vmem [thread:$0]  %s7, 1024, %s108, [#allocation15], 64, 64, 4
    $region33: #{tpu_custom_call.1} parent=1 // pred_fallthru
      _
    // Predicated region
    $region34: #{tpu_custom_call.1} parent=1 // pred_check
      _
    $region35: #{tpu_custom_call.1} parent=1 // pred_check_branch
      %115 = sbr.rel (0) target = $region37
    $region36: #{tpu_custom_call.1} parent=1 // pred_region
      %s117 = ssub.s32 1024, 1024
      %118 = vsyncadd [#allocation15], %s117
      %s119 = sshll.u32 [#allocation16], 4
      %s120 = int_to_ptr.vmem [resolvable:$true] %s119
      %125 = dma.hbm_to_vmem [thread:$0]  %s8, 1024, %s120, [#allocation15], 64, 64, 4
    $region37: #{tpu_custom_call.1} parent=1 // pred_fallthru
      _
    // Predicated region
    $region38: #{tpu_custom_call.1} parent=1 // pred_check
      _
    $region39: #{tpu_custom_call.1} parent=1 // pred_check_branch
      %127 = sbr.rel (0) target = $region41
    $region40: #{tpu_custom_call.1} parent=1 // pred_region
      %128 = dma.done [#allocation3], 512
    $region41: #{tpu_custom_call.1} parent=1 // pred_fallthru
      _
    // Predicated region
    $region42: #{tpu_custom_call.1} parent=1 // pred_check
      _
    $region43: #{tpu_custom_call.1} parent=1 // pred_check_branch
      %130 = sbr.rel (0) target = $region45
    $region44: #{tpu_custom_call.1} parent=1 // pred_region
      %131 = dma.done [#allocation6], 256
    $region45: #{tpu_custom_call.1} parent=1 // pred_fallthru
      _
    // Predicated region
    $region46: #{tpu_custom_call.1} parent=1 // pred_check
      _
    $region47: #{tpu_custom_call.1} parent=1 // pred_check_branch
      %133 = sbr.rel (0) target = $region49
    $region48: #{tpu_custom_call.1} parent=1 // pred_region
      %134 = dma.done [#allocation6], 128
    $region49: #{tpu_custom_call.1} parent=1 // pred_fallthru
      _
    // Predicated region
    $region50: #{tpu_custom_call.1} parent=1 // pred_check
      _
    $region51: #{tpu_custom_call.1} parent=1 // pred_check_branch
      %136 = sbr.rel (0) target = $region53
    $region52: #{tpu_custom_call.1} parent=1 // pred_region
      %137 = dma.done [#allocation9], 4096
    $region53: #{tpu_custom_call.1} parent=1 // pred_fallthru
      _
    // Predicated region
    $region54: #{tpu_custom_call.1} parent=1 // pred_check
      _
    $region55: #{tpu_custom_call.1} parent=1 // pred_check_branch
      %139 = sbr.rel (0) target = $region57
    $region56: #{tpu_custom_call.1} parent=1 // pred_region
      %140 = dma.done [#allocation9], 1024
    $region57: #{tpu_custom_call.1} parent=1 // pred_fallthru
      _
    // Predicated region
    $region58: #{tpu_custom_call.1} parent=1 // pred_check
      _
    $region59: #{tpu_custom_call.1} parent=1 // pred_check_branch
      %142 = sbr.rel (0) target = $region61
    $region60: #{tpu_custom_call.1} parent=1 // pred_region
      %143 = dma.done [#allocation12], 1024
    $region61: #{tpu_custom_call.1} parent=1 // pred_fallthru
      _
    // Predicated region
    $region62: #{tpu_custom_call.1} parent=1 // pred_check
      _
    $region63: #{tpu_custom_call.1} parent=1 // pred_check_branch
      %145 = sbr.rel (0) target = $region65
    $region64: #{tpu_custom_call.1} parent=1 // pred_region
      %146 = dma.done [#allocation12], 1024
    $region65: #{tpu_custom_call.1} parent=1 // pred_fallthru
      _
    // Predicated region
    $region66: #{tpu_custom_call.1} parent=1 // pred_check
      _
    $region67: #{tpu_custom_call.1} parent=1 // pred_check_branch
      %148 = sbr.rel (0) target = $region69
    $region68: #{tpu_custom_call.1} parent=1 // pred_region
      %149 = dma.done [#allocation15], 1024
    $region69: #{tpu_custom_call.1} parent=1 // pred_fallthru
      _
    // Predicated region
    $region70: #{tpu_custom_call.1} parent=1 // pred_check
      _
    $region71: #{tpu_custom_call.1} parent=1 // pred_check_branch
      %151 = sbr.rel (0) target = $region73
    $region72: #{tpu_custom_call.1} parent=1 // pred_region
      %152 = dma.done [#allocation15], 1024
    $region73: #{tpu_custom_call.1} parent=1 // pred_fallthru
      _
    %v154 = vld [vmem:[#allocation7] sm:$0xff]
    %v155 = vld [vmem:[#allocation2] sm:$0xff]
    %v156 = vld [vmem:[#allocation2 + $0x8] sm:$0xff]
    %v157 = vld [vmem:[#allocation2 + $0x10] sm:$0xff]
    %v158 = vld [vmem:[#allocation2 + $0x18] sm:$0xff]
    %v159 = vld [vmem:[#allocation8] sm:$0xf]
    %v160 = vld [vmem:[#allocation8 + $0x4] sm:$0xf]
    %v161 = vld [vmem:[#allocation8 + $0x8] sm:$0xf]
    %v162 = vld [vmem:[#allocation8 + $0xc] sm:$0xf]
    %v163 = vld [vmem:[#allocation8 + $0x10] sm:$0xf]
    %v164 = vld [vmem:[#allocation8 + $0x14] sm:$0xf]
    %v165 = vld [vmem:[#allocation8 + $0x18] sm:$0xf]
    %v166 = vld [vmem:[#allocation8 + $0x1c] sm:$0xf]
    %v167 = vld [vmem:[#allocation8 + $0x20] sm:$0xf]
    %v168 = vld [vmem:[#allocation8 + $0x24] sm:$0xf]
    %v169 = vld [vmem:[#allocation8 + $0x28] sm:$0xf]
    %v170 = vld [vmem:[#allocation8 + $0x2c] sm:$0xf]
    %v171 = vld [vmem:[#allocation8 + $0x30] sm:$0xf]
    %v172 = vld [vmem:[#allocation8 + $0x34] sm:$0xf]
    %v173 = vld [vmem:[#allocation8 + $0x38] sm:$0xf]
    %v174 = vld [vmem:[#allocation8 + $0x3c] sm:$0xf]
    %v175 = vld [vmem:[#allocation8 + $0x40] sm:$0xf]
    %v176 = vld [vmem:[#allocation8 + $0x44] sm:$0xf]
    %v177 = vld [vmem:[#allocation8 + $0x48] sm:$0xf]
    %v178 = vld [vmem:[#allocation8 + $0x4c] sm:$0xf]
    %v179 = vld [vmem:[#allocation8 + $0x50] sm:$0xf]
    %v180 = vld [vmem:[#allocation8 + $0x54] sm:$0xf]
    %v181 = vld [vmem:[#allocation8 + $0x58] sm:$0xf]
    %v182 = vld [vmem:[#allocation8 + $0x5c] sm:$0xf]
    %v183 = vld [vmem:[#allocation8 + $0x60] sm:$0xf]
    %v184 = vld [vmem:[#allocation8 + $0x64] sm:$0xf]
    %v185 = vld [vmem:[#allocation8 + $0x68] sm:$0xf]
    %v186 = vld [vmem:[#allocation8 + $0x6c] sm:$0xf]
    %v187 = vld [vmem:[#allocation8 + $0x70] sm:$0xf]
    %v188 = vld [vmem:[#allocation8 + $0x74] sm:$0xf]
    %v189 = vld [vmem:[#allocation8 + $0x78] sm:$0xf]
    %v190 = vld [vmem:[#allocation8 + $0x7c] sm:$0xf]
    %v191 = vld [vmem:[#allocation8 + $0x80] sm:$0xf]
    %v192 = vld [vmem:[#allocation8 + $0x84] sm:$0xf]
    %v193 = vld [vmem:[#allocation8 + $0x88] sm:$0xf]
    %v194 = vld [vmem:[#allocation8 + $0x8c] sm:$0xf]
    %v195 = vld [vmem:[#allocation8 + $0x90] sm:$0xf]
    %v196 = vld [vmem:[#allocation8 + $0x94] sm:$0xf]
    %v197 = vld [vmem:[#allocation8 + $0x98] sm:$0xf]
    %v198 = vld [vmem:[#allocation8 + $0x9c] sm:$0xf]
    %v199 = vld [vmem:[#allocation8 + $0xa0] sm:$0xf]
    %v200 = vld [vmem:[#allocation8 + $0xa4] sm:$0xf]
    %v201 = vld [vmem:[#allocation8 + $0xa8] sm:$0xf]
    %v202 = vld [vmem:[#allocation8 + $0xac] sm:$0xf]
    %v203 = vld [vmem:[#allocation8 + $0xb0] sm:$0xf]
    %v204 = vld [vmem:[#allocation8 + $0xb4] sm:$0xf]
    %v205 = vld [vmem:[#allocation8 + $0xb8] sm:$0xf]
    %v206 = vld [vmem:[#allocation8 + $0xbc] sm:$0xf]
    %v207 = vld [vmem:[#allocation8 + $0xc0] sm:$0xf]
    %v208 = vld [vmem:[#allocation8 + $0xc4] sm:$0xf]
    %v209 = vld [vmem:[#allocation8 + $0xc8] sm:$0xf]
    %v210 = vld [vmem:[#allocation8 + $0xcc] sm:$0xf]
    %v211 = vld [vmem:[#allocation8 + $0xd0] sm:$0xf]
    %v212 = vld [vmem:[#allocation8 + $0xd4] sm:$0xf]
    %v213 = vld [vmem:[#allocation8 + $0xd8] sm:$0xf]
    %v214 = vld [vmem:[#allocation8 + $0xdc] sm:$0xf]
    %v215 = vld [vmem:[#allocation8 + $0xe0] sm:$0xf]
    %v216 = vld [vmem:[#allocation8 + $0xe4] sm:$0xf]
    %v217 = vld [vmem:[#allocation8 + $0xe8] sm:$0xf]
    %v218 = vld [vmem:[#allocation8 + $0xec] sm:$0xf]
    %v219 = vld [vmem:[#allocation8 + $0xf0] sm:$0xf]
    %v220 = vld [vmem:[#allocation8 + $0xf4] sm:$0xf]
    %v221 = vld [vmem:[#allocation8 + $0xf8] sm:$0xf]
    %v222 = vld [vmem:[#allocation8 + $0xfc] sm:$0xf]
    %v223 = vlaneseq
    %v224 = vshrl.u32 %v223, 7
    %v225 = vsub.s32 0, %v224
    %v226 = vrot.slane %v154, %v225
    %v231 = vunpack.c.l.b16 %v155
    %v232 = vunpack.c.h.b16 %v155
    %v233 = vunpack.c.l.b16 %v156
    %v234 = vunpack.c.h.b16 %v156
    %v235 = vunpack.c.l.b16 %v157
    %v236 = vunpack.c.h.b16 %v157
    %v237 = vunpack.c.l.b16 %v158
    %v238 = vunpack.c.h.b16 %v158
    %v239 = vpack.c.b16 %v235, %v231
    %v240 = vpack.c.b16 %v236, %v232
    %v241 = vpack.c.b16 %v237, %v233
    %v242 = vpack.c.b16 %v238, %v234
    %v311 = vunpack.c.l.b16 %v159
    %v312 = vunpack.c.l.b16 %v160
    %v313 = vunpack.c.l.b16 %v161
    %v314 = vunpack.c.l.b16 %v162
    %v315 = vunpack.c.l.b16 %v163
    %v316 = vunpack.c.l.b16 %v164
    %v317 = vunpack.c.l.b16 %v165
    %v318 = vunpack.c.l.b16 %v166
    %v319 = vunpack.c.l.b16 %v167
    %v320 = vunpack.c.l.b16 %v168
    %v321 = vunpack.c.l.b16 %v169
    %v322 = vunpack.c.l.b16 %v170
    %v323 = vunpack.c.l.b16 %v171
    %v324 = vunpack.c.l.b16 %v172
    %v325 = vunpack.c.l.b16 %v173
    %v326 = vunpack.c.l.b16 %v174
    %v327 = vunpack.c.l.b16 %v175
    %v328 = vunpack.c.l.b16 %v176
    %v329 = vunpack.c.l.b16 %v177
    %v330 = vunpack.c.l.b16 %v178
    %v331 = vunpack.c.l.b16 %v179
    %v332 = vunpack.c.l.b16 %v180
    %v333 = vunpack.c.l.b16 %v181
    %v334 = vunpack.c.l.b16 %v182
    %v335 = vunpack.c.l.b16 %v183
    %v336 = vunpack.c.l.b16 %v184
    %v337 = vunpack.c.l.b16 %v185
    %v338 = vunpack.c.l.b16 %v186
    %v339 = vunpack.c.l.b16 %v187
    %v340 = vunpack.c.l.b16 %v188
    %v341 = vunpack.c.l.b16 %v189
    %v342 = vunpack.c.l.b16 %v190
    %v343 = vunpack.c.l.b16 %v191
    %v344 = vunpack.c.l.b16 %v192
    %v345 = vunpack.c.l.b16 %v193
    %v346 = vunpack.c.l.b16 %v194
    %v347 = vunpack.c.l.b16 %v195
    %v348 = vunpack.c.l.b16 %v196
    %v349 = vunpack.c.l.b16 %v197
    %v350 = vunpack.c.l.b16 %v198
    %v351 = vunpack.c.l.b16 %v199
    %v352 = vunpack.c.l.b16 %v200
    %v353 = vunpack.c.l.b16 %v201
    %v354 = vunpack.c.l.b16 %v202
    %v355 = vunpack.c.l.b16 %v203
    %v356 = vunpack.c.l.b16 %v204
    %v357 = vunpack.c.l.b16 %v205
    %v358 = vunpack.c.l.b16 %v206
    %v359 = vunpack.c.l.b16 %v207
    %v360 = vunpack.c.l.b16 %v208
    %v361 = vunpack.c.l.b16 %v209
    %v362 = vunpack.c.l.b16 %v210
    %v363 = vunpack.c.l.b16 %v211
    %v364 = vunpack.c.l.b16 %v212
    %v365 = vunpack.c.l.b16 %v213
    %v366 = vunpack.c.l.b16 %v214
    %v367 = vunpack.c.l.b16 %v215
    %v368 = vunpack.c.l.b16 %v216
    %v369 = vunpack.c.l.b16 %v217
    %v370 = vunpack.c.l.b16 %v218
    %v371 = vunpack.c.l.b16 %v219
    %v372 = vunpack.c.l.b16 %v220
    %v373 = vunpack.c.l.b16 %v221
    %v374 = vunpack.c.l.b16 %v222
    %v375 = vpack.c.b16 %v312, %v311
    %v376 = vpack.c.b16 %v314, %v313
    %v377 = vpack.c.b16 %v316, %v315
    %v378 = vpack.c.b16 %v318, %v317
    %v379 = vpack.c.b16 %v320, %v319
    %v380 = vpack.c.b16 %v322, %v321
    %v381 = vpack.c.b16 %v324, %v323
    %v382 = vpack.c.b16 %v326, %v325
    %v383 = vpack.c.b16 %v328, %v327
    %v384 = vpack.c.b16 %v330, %v329
    %v385 = vpack.c.b16 %v332, %v331
    %v386 = vpack.c.b16 %v334, %v333
    %v387 = vpack.c.b16 %v336, %v335
    %v388 = vpack.c.b16 %v338, %v337
    %v389 = vpack.c.b16 %v340, %v339
    %v390 = vpack.c.b16 %v342, %v341
    %v391 = vpack.c.b16 %v344, %v343
    %v392 = vpack.c.b16 %v346, %v345
    %v393 = vpack.c.b16 %v348, %v347
    %v394 = vpack.c.b16 %v350, %v349
    %v395 = vpack.c.b16 %v352, %v351
    %v396 = vpack.c.b16 %v354, %v353
    %v397 = vpack.c.b16 %v356, %v355
    %v398 = vpack.c.b16 %v358, %v357
    %v399 = vpack.c.b16 %v360, %v359
    %v400 = vpack.c.b16 %v362, %v361
    %v401 = vpack.c.b16 %v364, %v363
    %v402 = vpack.c.b16 %v366, %v365
    %v403 = vpack.c.b16 %v368, %v367
    %v404 = vpack.c.b16 %v370, %v369
    %v405 = vpack.c.b16 %v372, %v371
    %v406 = vpack.c.b16 %v374, %v373
    %439 = vmatprep.subr.bf16.mxu0 0
    %440 = vmatpush1.bf16.msra.mxu0 %v382
    %441 = vmatprep.subr.bf16.mxu0 0
    %442 = vmatpush1.bf16.msra.mxu0 %v381
    %443 = vmatprep.subr.bf16.mxu0 0
    %444 = vmatpush1.bf16.msra.mxu0 %v380
    %445 = vmatprep.subr.bf16.mxu0 0
    %446 = vmatpush1.bf16.msra.mxu0 %v379
    %447 = vmatprep.subr.bf16.mxu0 0
    %448 = vmatpush1.bf16.msra.mxu0 %v378
    %449 = vmatprep.subr.bf16.mxu0 0
    %450 = vmatpush1.bf16.msra.mxu0 %v377
    %451 = vmatprep.subr.bf16.mxu0 0
    %452 = vmatpush1.bf16.msra.mxu0 %v376
    %453 = vmatprep.subr.bf16.mxu0 0
    %454 = vmatpush1.bf16.msra.mxu0 %v375
    %455 = vmatprep.subr.bf16.mxu0 0
    %456 = vmatpush2.bf16.msra.mxu0 %v390
    %457 = vmatprep.subr.bf16.mxu0 0
    %458 = vmatpush2.bf16.msra.mxu0 %v389
    %459 = vmatprep.subr.bf16.mxu0 0
    %460 = vmatpush2.bf16.msra.mxu0 %v388
    %461 = vmatprep.subr.bf16.mxu0 0
    %462 = vmatpush2.bf16.msra.mxu0 %v387
    %463 = vmatprep.subr.bf16.mxu0 0
    %464 = vmatpush2.bf16.msra.mxu0 %v386
    %465 = vmatprep.subr.bf16.mxu0 0
    %466 = vmatpush2.bf16.msra.mxu0 %v385
    %467 = vmatprep.subr.bf16.mxu0 0
    %468 = vmatpush2.bf16.msra.mxu0 %v384
    %469 = vmatprep.subr.bf16.mxu0 0
    %470 = vmatpush2.bf16.msra.mxu0 %v383
    %471 = vmatprep.mubr.bf16.mxu0 %v240
    %472 = vmatmul.mubr.bf16.gmra.mxu0 %v239
    %v473 = vpop.f32.mrf.mxu0
    %v474 = vadd.f32 %v226, %v473
    %v475 = vpop.f32.mrf.mxu0
    %v476 = vpop.f32.mrf.mxu0
    %v477 = vadd.f32 %v226, %v476
    %v478 = vpop.f32.mrf.mxu0
    %479 = vdwg.mxu0
    %480 = vmatprep.subr.bf16.mxu0 0
    %481 = vmatpush1.bf16.msra.mxu0 %v398
    %482 = vmatprep.subr.bf16.mxu0 0
    %483 = vmatpush1.bf16.msra.mxu0 %v397
    %484 = vmatprep.subr.bf16.mxu0 0
    %485 = vmatpush1.bf16.msra.mxu0 %v396
    %486 = vmatprep.subr.bf16.mxu0 0
    %487 = vmatpush1.bf16.msra.mxu0 %v395
    %488 = vmatprep.subr.bf16.mxu0 0
    %489 = vmatpush1.bf16.msra.mxu0 %v394
    %490 = vmatprep.subr.bf16.mxu0 0
    %491 = vmatpush1.bf16.msra.mxu0 %v393
    %492 = vmatprep.subr.bf16.mxu0 0
    %493 = vmatpush1.bf16.msra.mxu0 %v392
    %494 = vmatprep.subr.bf16.mxu0 0
    %495 = vmatpush1.bf16.msra.mxu0 %v391
    %496 = vmatprep.subr.bf16.mxu0 0
    %497 = vmatpush2.bf16.msra.mxu0 %v406
    %498 = vmatprep.subr.bf16.mxu0 0
    %499 = vmatpush2.bf16.msra.mxu0 %v405
    %500 = vmatprep.subr.bf16.mxu0 0
    %501 = vmatpush2.bf16.msra.mxu0 %v404
    %502 = vmatprep.subr.bf16.mxu0 0
    %503 = vmatpush2.bf16.msra.mxu0 %v403
    %504 = vmatprep.subr.bf16.mxu0 0
    %505 = vmatpush2.bf16.msra.mxu0 %v402
    %506 = vmatprep.subr.bf16.mxu0 0
    %507 = vmatpush2.bf16.msra.mxu0 %v401
    %508 = vmatprep.subr.bf16.mxu0 0
    %509 = vmatpush2.bf16.msra.mxu0 %v400
    %510 = vmatprep.subr.bf16.mxu0 0
    %511 = vmatpush2.bf16.msra.mxu0 %v399
    %512 = vmatprep.mubr.bf16.mxu0 %v242
    %513 = vmatmul.mubr.bf16.gmra.mxu0 %v241
    %v514 = vpop.f32.mrf.mxu0
    %v515 = vadd.f32 %v474, %v514
    %v516 = vpop.f32.mrf.mxu0
    %v517 = vpop.f32.mrf.mxu0
    %v518 = vadd.f32 %v477, %v517
    %v519 = vpop.f32.mrf.mxu0
    %520 = vdwg.mxu0
    %v521 = vmax.f32 %v515, 0.0
    %v522 = vmax.f32 %v518, 0.0
    %v523 = vpack.c.bf16 %v522, %v521
    %v524 = vld [vmem:[#allocation10] sm:$0xf]
    %v525 = vld [vmem:[#allocation10 + $0x4] sm:$0xf]
    %v526 = vld [vmem:[#allocation10 + $0x8] sm:$0xf]
    %v527 = vld [vmem:[#allocation10 + $0xc] sm:$0xf]
    %v528 = vld [vmem:[#allocation10 + $0x10] sm:$0xf]
    %v529 = vld [vmem:[#allocation10 + $0x14] sm:$0xf]
    %v530 = vld [vmem:[#allocation10 + $0x18] sm:$0xf]
    %v531 = vld [vmem:[#allocation10 + $0x1c] sm:$0xf]
    %v532 = vld [vmem:[#allocation10 + $0x20] sm:$0xf]
    %v533 = vld [vmem:[#allocation10 + $0x24] sm:$0xf]
    %v534 = vld [vmem:[#allocation10 + $0x28] sm:$0xf]
    %v535 = vld [vmem:[#allocation10 + $0x2c] sm:$0xf]
    %v536 = vld [vmem:[#allocation10 + $0x30] sm:$0xf]
    %v537 = vld [vmem:[#allocation10 + $0x34] sm:$0xf]
    %v538 = vld [vmem:[#allocation10 + $0x38] sm:$0xf]
    %v539 = vld [vmem:[#allocation10 + $0x3c] sm:$0xf]
    %v540 = vlaneseq
    %v541 = vshrl.u32 %v540, 7
    %v542 = vsub.s32 1, %v541
    %v543 = vrot.slane %v154, %v542
    %v560 = vunpack.c.l.b16 %v524
    %v561 = vunpack.c.l.b16 %v525
    %v562 = vunpack.c.l.b16 %v526
    %v563 = vunpack.c.l.b16 %v527
    %v564 = vunpack.c.l.b16 %v528
    %v565 = vunpack.c.l.b16 %v529
    %v566 = vunpack.c.l.b16 %v530
    %v567 = vunpack.c.l.b16 %v531
    %v568 = vunpack.c.l.b16 %v532
    %v569 = vunpack.c.l.b16 %v533
    %v570 = vunpack.c.l.b16 %v534
    %v571 = vunpack.c.l.b16 %v535
    %v572 = vunpack.c.l.b16 %v536
    %v573 = vunpack.c.l.b16 %v537
    %v574 = vunpack.c.l.b16 %v538
    %v575 = vunpack.c.l.b16 %v539
    %v576 = vpack.c.b16 %v561, %v560
    %v577 = vpack.c.b16 %v563, %v562
    %v578 = vpack.c.b16 %v565, %v564
    %v579 = vpack.c.b16 %v567, %v566
    %v580 = vpack.c.b16 %v569, %v568
    %v581 = vpack.c.b16 %v571, %v570
    %v582 = vpack.c.b16 %v573, %v572
    %v583 = vpack.c.b16 %v575, %v574
    %592 = vmatprep.subr.bf16.mxu0 0
    %593 = vmatpush1.bf16.msra.mxu0 %v583
    %594 = vmatprep.subr.bf16.mxu0 0
    %595 = vmatpush1.bf16.msra.mxu0 %v582
    %596 = vmatprep.subr.bf16.mxu0 0
    %597 = vmatpush1.bf16.msra.mxu0 %v581
    %598 = vmatprep.subr.bf16.mxu0 0
    %599 = vmatpush1.bf16.msra.mxu0 %v580
    %600 = vmatprep.subr.bf16.mxu0 0
    %601 = vmatpush1.bf16.msra.mxu0 %v579
    %602 = vmatprep.subr.bf16.mxu0 0
    %603 = vmatpush1.bf16.msra.mxu0 %v578
    %604 = vmatprep.subr.bf16.mxu0 0
    %605 = vmatpush1.bf16.msra.mxu0 %v577
    %606 = vmatprep.subr.bf16.mxu0 0
    %607 = vmatpush1.bf16.msra.mxu0 %v576
    %608 = vmatprep.subr.bf16.mxu0 0
    %609 = vmatpush2.bf16.msra.mxu0 0
    %610 = vmatprep.subr.bf16.mxu0 0
    %611 = vmatpush2.bf16.msra.mxu0 0
    %612 = vmatprep.subr.bf16.mxu0 0
    %613 = vmatpush2.bf16.msra.mxu0 0
    %614 = vmatprep.subr.bf16.mxu0 0
    %615 = vmatpush2.bf16.msra.mxu0 0
    %616 = vmatprep.subr.bf16.mxu0 0
    %617 = vmatpush2.bf16.msra.mxu0 0
    %618 = vmatprep.subr.bf16.mxu0 0
    %619 = vmatpush2.bf16.msra.mxu0 0
    %620 = vmatprep.subr.bf16.mxu0 0
    %621 = vmatpush2.bf16.msra.mxu0 0
    %622 = vmatprep.subr.bf16.mxu0 0
    %623 = vmatpush2.bf16.msra.mxu0 0
    %624 = vmatprep.mubr.bf16.mxu0 0
    %625 = vmatmul.mubr.bf16.gmra.mxu0 %v523
    %v626 = vpop.f32.mrf.mxu0
    %v627 = vadd.f32 %v543, %v626
    %v628 = vpop.f32.mrf.mxu0
    %v629 = vpop.f32.mrf.mxu0
    %v630 = vadd.f32 %v543, %v629
    %v631 = vpop.f32.mrf.mxu0
    %632 = vdwg.mxu0
    %v633 = vmax.f32 %v627, 0.0
    %v634 = vmax.f32 %v630, 0.0
    %v635 = vpack.c.bf16 %v634, %v633
    %v636 = vld [vmem:[#allocation11] sm:$0xf]
    %v637 = vld [vmem:[#allocation11 + $0x4] sm:$0xf]
    %v638 = vld [vmem:[#allocation11 + $0x8] sm:$0xf]
    %v639 = vld [vmem:[#allocation11 + $0xc] sm:$0xf]
    %v640 = vld [vmem:[#allocation11 + $0x10] sm:$0xf]
    %v641 = vld [vmem:[#allocation11 + $0x14] sm:$0xf]
    %v642 = vld [vmem:[#allocation11 + $0x18] sm:$0xf]
    %v643 = vld [vmem:[#allocation11 + $0x1c] sm:$0xf]
    %v644 = vld [vmem:[#allocation11 + $0x20] sm:$0xf]
    %v645 = vld [vmem:[#allocation11 + $0x24] sm:$0xf]
    %v646 = vld [vmem:[#allocation11 + $0x28] sm:$0xf]
    %v647 = vld [vmem:[#allocation11 + $0x2c] sm:$0xf]
    %v648 = vld [vmem:[#allocation11 + $0x30] sm:$0xf]
    %v649 = vld [vmem:[#allocation11 + $0x34] sm:$0xf]
    %v650 = vld [vmem:[#allocation11 + $0x38] sm:$0xf]
    %v651 = vld [vmem:[#allocation11 + $0x3c] sm:$0xf]
    %v652 = vlaneseq
    %v653 = vshrl.u32 %v652, 7
    %v654 = vsub.s32 2, %v653
    %v655 = vrot.slane %v154, %v654
    %v672 = vunpack.c.l.b16 %v636
    %v673 = vunpack.c.l.b16 %v637
    %v674 = vunpack.c.l.b16 %v638
    %v675 = vunpack.c.l.b16 %v639
    %v676 = vunpack.c.l.b16 %v640
    %v677 = vunpack.c.l.b16 %v641
    %v678 = vunpack.c.l.b16 %v642
    %v679 = vunpack.c.l.b16 %v643
    %v680 = vunpack.c.l.b16 %v644
    %v681 = vunpack.c.l.b16 %v645
    %v682 = vunpack.c.l.b16 %v646
    %v683 = vunpack.c.l.b16 %v647
    %v684 = vunpack.c.l.b16 %v648
    %v685 = vunpack.c.l.b16 %v649
    %v686 = vunpack.c.l.b16 %v650
    %v687 = vunpack.c.l.b16 %v651
    %v688 = vpack.c.b16 %v673, %v672
    %v689 = vpack.c.b16 %v675, %v674
    %v690 = vpack.c.b16 %v677, %v676
    %v691 = vpack.c.b16 %v679, %v678
    %v692 = vpack.c.b16 %v681, %v680
    %v693 = vpack.c.b16 %v683, %v682
    %v694 = vpack.c.b16 %v685, %v684
    %v695 = vpack.c.b16 %v687, %v686
    %704 = vmatprep.subr.bf16.mxu0 0
    %705 = vmatpush1.bf16.msra.mxu0 %v695
    %706 = vmatprep.subr.bf16.mxu0 0
    %707 = vmatpush1.bf16.msra.mxu0 %v694
    %708 = vmatprep.subr.bf16.mxu0 0
    %709 = vmatpush1.bf16.msra.mxu0 %v693
    %710 = vmatprep.subr.bf16.mxu0 0
    %711 = vmatpush1.bf16.msra.mxu0 %v692
    %712 = vmatprep.subr.bf16.mxu0 0
    %713 = vmatpush1.bf16.msra.mxu0 %v691
    %714 = vmatprep.subr.bf16.mxu0 0
    %715 = vmatpush1.bf16.msra.mxu0 %v690
    %716 = vmatprep.subr.bf16.mxu0 0
    %717 = vmatpush1.bf16.msra.mxu0 %v689
    %718 = vmatprep.subr.bf16.mxu0 0
    %719 = vmatpush1.bf16.msra.mxu0 %v688
    %720 = vmatprep.subr.bf16.mxu0 0
    %721 = vmatpush2.bf16.msra.mxu0 0
    %722 = vmatprep.subr.bf16.mxu0 0
    %723 = vmatpush2.bf16.msra.mxu0 0
    %724 = vmatprep.subr.bf16.mxu0 0
    %725 = vmatpush2.bf16.msra.mxu0 0
    %726 = vmatprep.subr.bf16.mxu0 0
    %727 = vmatpush2.bf16.msra.mxu0 0
    %728 = vmatprep.subr.bf16.mxu0 0
    %729 = vmatpush2.bf16.msra.mxu0 0
    %730 = vmatprep.subr.bf16.mxu0 0
    %731 = vmatpush2.bf16.msra.mxu0 0
    %732 = vmatprep.subr.bf16.mxu0 0
    %733 = vmatpush2.bf16.msra.mxu0 0
    %734 = vmatprep.subr.bf16.mxu0 0
    %735 = vmatpush2.bf16.msra.mxu0 0
    %736 = vmatprep.mubr.bf16.mxu0 0
    %737 = vmatmul.mubr.bf16.gmra.mxu0 %v635
    %v738 = vpop.f32.mrf.mxu0
    %v739 = vadd.f32 %v655, %v738
    %v740 = vpop.f32.mrf.mxu0
    %v741 = vpop.f32.mrf.mxu0
    %v742 = vadd.f32 %v655, %v741
    %v743 = vpop.f32.mrf.mxu0
    %744 = vdwg.mxu0
    %v745 = vmax.f32 %v739, 0.0
    %v746 = vmax.f32 %v742, 0.0
    %v747 = vpack.c.bf16 %v746, %v745
    %v748 = vld [vmem:[#allocation13] sm:$0xf]
    %v749 = vld [vmem:[#allocation13 + $0x4] sm:$0xf]
    %v750 = vld [vmem:[#allocation13 + $0x8] sm:$0xf]
    %v751 = vld [vmem:[#allocation13 + $0xc] sm:$0xf]
    %v752 = vld [vmem:[#allocation13 + $0x10] sm:$0xf]
    %v753 = vld [vmem:[#allocation13 + $0x14] sm:$0xf]
    %v754 = vld [vmem:[#allocation13 + $0x18] sm:$0xf]
    %v755 = vld [vmem:[#allocation13 + $0x1c] sm:$0xf]
    %v756 = vld [vmem:[#allocation13 + $0x20] sm:$0xf]
    %v757 = vld [vmem:[#allocation13 + $0x24] sm:$0xf]
    %v758 = vld [vmem:[#allocation13 + $0x28] sm:$0xf]
    %v759 = vld [vmem:[#allocation13 + $0x2c] sm:$0xf]
    %v760 = vld [vmem:[#allocation13 + $0x30] sm:$0xf]
    %v761 = vld [vmem:[#allocation13 + $0x34] sm:$0xf]
    %v762 = vld [vmem:[#allocation13 + $0x38] sm:$0xf]
    %v763 = vld [vmem:[#allocation13 + $0x3c] sm:$0xf]
    %v764 = vlaneseq
    %v765 = vshrl.u32 %v764, 7
    %v766 = vsub.s32 3, %v765
    %v767 = vrot.slane %v154, %v766
    %v784 = vunpack.c.l.b16 %v748
    %v785 = vunpack.c.l.b16 %v749
    %v786 = vunpack.c.l.b16 %v750
    %v787 = vunpack.c.l.b16 %v751
    %v788 = vunpack.c.l.b16 %v752
    %v789 = vunpack.c.l.b16 %v753
    %v790 = vunpack.c.l.b16 %v754
    %v791 = vunpack.c.l.b16 %v755
    %v792 = vunpack.c.l.b16 %v756
    %v793 = vunpack.c.l.b16 %v757
    %v794 = vunpack.c.l.b16 %v758
    %v795 = vunpack.c.l.b16 %v759
    %v796 = vunpack.c.l.b16 %v760
    %v797 = vunpack.c.l.b16 %v761
    %v798 = vunpack.c.l.b16 %v762
    %v799 = vunpack.c.l.b16 %v763
    %v800 = vpack.c.b16 %v785, %v784
    %v801 = vpack.c.b16 %v787, %v786
    %v802 = vpack.c.b16 %v789, %v788
    %v803 = vpack.c.b16 %v791, %v790
    %v804 = vpack.c.b16 %v793, %v792
    %v805 = vpack.c.b16 %v795, %v794
    %v806 = vpack.c.b16 %v797, %v796
    %v807 = vpack.c.b16 %v799, %v798
    %816 = vmatprep.subr.bf16.mxu0 0
    %817 = vmatpush1.bf16.msra.mxu0 %v807
    %818 = vmatprep.subr.bf16.mxu0 0
    %819 = vmatpush1.bf16.msra.mxu0 %v806
    %820 = vmatprep.subr.bf16.mxu0 0
    %821 = vmatpush1.bf16.msra.mxu0 %v805
    %822 = vmatprep.subr.bf16.mxu0 0
    %823 = vmatpush1.bf16.msra.mxu0 %v804
    %824 = vmatprep.subr.bf16.mxu0 0
    %825 = vmatpush1.bf16.msra.mxu0 %v803
    %826 = vmatprep.subr.bf16.mxu0 0
    %827 = vmatpush1.bf16.msra.mxu0 %v802
    %828 = vmatprep.subr.bf16.mxu0 0
    %829 = vmatpush1.bf16.msra.mxu0 %v801
    %830 = vmatprep.subr.bf16.mxu0 0
    %831 = vmatpush1.bf16.msra.mxu0 %v800
    %832 = vmatprep.subr.bf16.mxu0 0
    %833 = vmatpush2.bf16.msra.mxu0 0
    %834 = vmatprep.subr.bf16.mxu0 0
    %835 = vmatpush2.bf16.msra.mxu0 0
    %836 = vmatprep.subr.bf16.mxu0 0
    %837 = vmatpush2.bf16.msra.mxu0 0
    %838 = vmatprep.subr.bf16.mxu0 0
    %839 = vmatpush2.bf16.msra.mxu0 0
    %840 = vmatprep.subr.bf16.mxu0 0
    %841 = vmatpush2.bf16.msra.mxu0 0
    %842 = vmatprep.subr.bf16.mxu0 0
    %843 = vmatpush2.bf16.msra.mxu0 0
    %844 = vmatprep.subr.bf16.mxu0 0
    %845 = vmatpush2.bf16.msra.mxu0 0
    %846 = vmatprep.subr.bf16.mxu0 0
    %847 = vmatpush2.bf16.msra.mxu0 0
    %848 = vmatprep.mubr.bf16.mxu0 0
    %849 = vmatmul.mubr.bf16.gmra.mxu0 %v747
    %v850 = vpop.f32.mrf.mxu0
    %v851 = vadd.f32 %v767, %v850
    %v852 = vpop.f32.mrf.mxu0
    %v853 = vpop.f32.mrf.mxu0
    %v854 = vadd.f32 %v767, %v853
    %v855 = vpop.f32.mrf.mxu0
    %856 = vdwg.mxu0
    %v857 = vmax.f32 %v851, 0.0
    %v858 = vmax.f32 %v854, 0.0
    %v859 = vpack.c.bf16 %v858, %v857
    %v860 = vld [vmem:[#allocation14] sm:$0xf]
    %v861 = vld [vmem:[#allocation14 + $0x4] sm:$0xf]
    %v862 = vld [vmem:[#allocation14 + $0x8] sm:$0xf]
    %v863 = vld [vmem:[#allocation14 + $0xc] sm:$0xf]
    %v864 = vld [vmem:[#allocation14 + $0x10] sm:$0xf]
    %v865 = vld [vmem:[#allocation14 + $0x14] sm:$0xf]
    %v866 = vld [vmem:[#allocation14 + $0x18] sm:$0xf]
    %v867 = vld [vmem:[#allocation14 + $0x1c] sm:$0xf]
    %v868 = vld [vmem:[#allocation14 + $0x20] sm:$0xf]
    %v869 = vld [vmem:[#allocation14 + $0x24] sm:$0xf]
    %v870 = vld [vmem:[#allocation14 + $0x28] sm:$0xf]
    %v871 = vld [vmem:[#allocation14 + $0x2c] sm:$0xf]
    %v872 = vld [vmem:[#allocation14 + $0x30] sm:$0xf]
    %v873 = vld [vmem:[#allocation14 + $0x34] sm:$0xf]
    %v874 = vld [vmem:[#allocation14 + $0x38] sm:$0xf]
    %v875 = vld [vmem:[#allocation14 + $0x3c] sm:$0xf]
    %v876 = vlaneseq
    %v877 = vshrl.u32 %v876, 7
    %v878 = vsub.s32 4, %v877
    %v879 = vrot.slane %v154, %v878
    %v896 = vunpack.c.l.b16 %v860
    %v897 = vunpack.c.l.b16 %v861
    %v898 = vunpack.c.l.b16 %v862
    %v899 = vunpack.c.l.b16 %v863
    %v900 = vunpack.c.l.b16 %v864
    %v901 = vunpack.c.l.b16 %v865
    %v902 = vunpack.c.l.b16 %v866
    %v903 = vunpack.c.l.b16 %v867
    %v904 = vunpack.c.l.b16 %v868
    %v905 = vunpack.c.l.b16 %v869
    %v906 = vunpack.c.l.b16 %v870
    %v907 = vunpack.c.l.b16 %v871
    %v908 = vunpack.c.l.b16 %v872
    %v909 = vunpack.c.l.b16 %v873
    %v910 = vunpack.c.l.b16 %v874
    %v911 = vunpack.c.l.b16 %v875
    %v912 = vpack.c.b16 %v897, %v896
    %v913 = vpack.c.b16 %v899, %v898
    %v914 = vpack.c.b16 %v901, %v900
    %v915 = vpack.c.b16 %v903, %v902
    %v916 = vpack.c.b16 %v905, %v904
    %v917 = vpack.c.b16 %v907, %v906
    %v918 = vpack.c.b16 %v909, %v908
    %v919 = vpack.c.b16 %v911, %v910
    %928 = vmatprep.subr.bf16.mxu0 0
    %929 = vmatpush1.bf16.msra.mxu0 %v919
    %930 = vmatprep.subr.bf16.mxu0 0
    %931 = vmatpush1.bf16.msra.mxu0 %v918
    %932 = vmatprep.subr.bf16.mxu0 0
    %933 = vmatpush1.bf16.msra.mxu0 %v917
    %934 = vmatprep.subr.bf16.mxu0 0
    %935 = vmatpush1.bf16.msra.mxu0 %v916
    %936 = vmatprep.subr.bf16.mxu0 0
    %937 = vmatpush1.bf16.msra.mxu0 %v915
    %938 = vmatprep.subr.bf16.mxu0 0
    %939 = vmatpush1.bf16.msra.mxu0 %v914
    %940 = vmatprep.subr.bf16.mxu0 0
    %941 = vmatpush1.bf16.msra.mxu0 %v913
    %942 = vmatprep.subr.bf16.mxu0 0
    %943 = vmatpush1.bf16.msra.mxu0 %v912
    %944 = vmatprep.subr.bf16.mxu0 0
    %945 = vmatpush2.bf16.msra.mxu0 0
    %946 = vmatprep.subr.bf16.mxu0 0
    %947 = vmatpush2.bf16.msra.mxu0 0
    %948 = vmatprep.subr.bf16.mxu0 0
    %949 = vmatpush2.bf16.msra.mxu0 0
    %950 = vmatprep.subr.bf16.mxu0 0
    %951 = vmatpush2.bf16.msra.mxu0 0
    %952 = vmatprep.subr.bf16.mxu0 0
    %953 = vmatpush2.bf16.msra.mxu0 0
    %954 = vmatprep.subr.bf16.mxu0 0
    %955 = vmatpush2.bf16.msra.mxu0 0
    %956 = vmatprep.subr.bf16.mxu0 0
    %957 = vmatpush2.bf16.msra.mxu0 0
    %958 = vmatprep.subr.bf16.mxu0 0
    %959 = vmatpush2.bf16.msra.mxu0 0
    %960 = vmatprep.mubr.bf16.mxu0 0
    %961 = vmatmul.mubr.bf16.gmra.mxu0 %v859
    %v962 = vpop.f32.mrf.mxu0
    %v963 = vadd.f32 %v879, %v962
    %v964 = vpop.f32.mrf.mxu0
    %v965 = vpop.f32.mrf.mxu0
    %v966 = vadd.f32 %v879, %v965
    %v967 = vpop.f32.mrf.mxu0
    %968 = vdwg.mxu0
    %v969 = vmax.f32 %v963, 0.0
    %v970 = vmax.f32 %v966, 0.0
    %v971 = vpack.c.bf16 %v970, %v969
    %v972 = vld [vmem:[#allocation16] sm:$0xf]
    %v973 = vld [vmem:[#allocation16 + $0x4] sm:$0xf]
    %v974 = vld [vmem:[#allocation16 + $0x8] sm:$0xf]
    %v975 = vld [vmem:[#allocation16 + $0xc] sm:$0xf]
    %v976 = vld [vmem:[#allocation16 + $0x10] sm:$0xf]
    %v977 = vld [vmem:[#allocation16 + $0x14] sm:$0xf]
    %v978 = vld [vmem:[#allocation16 + $0x18] sm:$0xf]
    %v979 = vld [vmem:[#allocation16 + $0x1c] sm:$0xf]
    %v980 = vld [vmem:[#allocation16 + $0x20] sm:$0xf]
    %v981 = vld [vmem:[#allocation16 + $0x24] sm:$0xf]
    %v982 = vld [vmem:[#allocation16 + $0x28] sm:$0xf]
    %v983 = vld [vmem:[#allocation16 + $0x2c] sm:$0xf]
    %v984 = vld [vmem:[#allocation16 + $0x30] sm:$0xf]
    %v985 = vld [vmem:[#allocation16 + $0x34] sm:$0xf]
    %v986 = vld [vmem:[#allocation16 + $0x38] sm:$0xf]
    %v987 = vld [vmem:[#allocation16 + $0x3c] sm:$0xf]
    %v988 = vlaneseq
    %v989 = vshrl.u32 %v988, 7
    %v990 = vsub.s32 5, %v989
    %v991 = vrot.slane %v154, %v990
    %v1008 = vunpack.c.l.b16 %v972
    %v1009 = vunpack.c.l.b16 %v973
    %v1010 = vunpack.c.l.b16 %v974
    %v1011 = vunpack.c.l.b16 %v975
    %v1012 = vunpack.c.l.b16 %v976
    %v1013 = vunpack.c.l.b16 %v977
    %v1014 = vunpack.c.l.b16 %v978
    %v1015 = vunpack.c.l.b16 %v979
    %v1016 = vunpack.c.l.b16 %v980
    %v1017 = vunpack.c.l.b16 %v981
    %v1018 = vunpack.c.l.b16 %v982
    %v1019 = vunpack.c.l.b16 %v983
    %v1020 = vunpack.c.l.b16 %v984
    %v1021 = vunpack.c.l.b16 %v985
    %v1022 = vunpack.c.l.b16 %v986
    %v1023 = vunpack.c.l.b16 %v987
    %v1024 = vpack.c.b16 %v1009, %v1008
    %v1025 = vpack.c.b16 %v1011, %v1010
    %v1026 = vpack.c.b16 %v1013, %v1012
    %v1027 = vpack.c.b16 %v1015, %v1014
    %v1028 = vpack.c.b16 %v1017, %v1016
    %v1029 = vpack.c.b16 %v1019, %v1018
    %v1030 = vpack.c.b16 %v1021, %v1020
    %v1031 = vpack.c.b16 %v1023, %v1022
    %1040 = vmatprep.subr.bf16.mxu0 0
    %1041 = vmatpush1.bf16.msra.mxu0 %v1031
    %1042 = vmatprep.subr.bf16.mxu0 0
    %1043 = vmatpush1.bf16.msra.mxu0 %v1030
    %1044 = vmatprep.subr.bf16.mxu0 0
    %1045 = vmatpush1.bf16.msra.mxu0 %v1029
    %1046 = vmatprep.subr.bf16.mxu0 0
    %1047 = vmatpush1.bf16.msra.mxu0 %v1028
    %1048 = vmatprep.subr.bf16.mxu0 0
    %1049 = vmatpush1.bf16.msra.mxu0 %v1027
    %1050 = vmatprep.subr.bf16.mxu0 0
    %1051 = vmatpush1.bf16.msra.mxu0 %v1026
    %1052 = vmatprep.subr.bf16.mxu0 0
    %1053 = vmatpush1.bf16.msra.mxu0 %v1025
    %1054 = vmatprep.subr.bf16.mxu0 0
    %1055 = vmatpush1.bf16.msra.mxu0 %v1024
    %1056 = vmatprep.subr.bf16.mxu0 0
    %1057 = vmatpush2.bf16.msra.mxu0 0
    %1058 = vmatprep.subr.bf16.mxu0 0
    %1059 = vmatpush2.bf16.msra.mxu0 0
    %1060 = vmatprep.subr.bf16.mxu0 0
    %1061 = vmatpush2.bf16.msra.mxu0 0
    %1062 = vmatprep.subr.bf16.mxu0 0
    %1063 = vmatpush2.bf16.msra.mxu0 0
    %1064 = vmatprep.subr.bf16.mxu0 0
    %1065 = vmatpush2.bf16.msra.mxu0 0
    %1066 = vmatprep.subr.bf16.mxu0 0
    %1067 = vmatpush2.bf16.msra.mxu0 0
    %1068 = vmatprep.subr.bf16.mxu0 0
    %1069 = vmatpush2.bf16.msra.mxu0 0
    %1070 = vmatprep.subr.bf16.mxu0 0
    %1071 = vmatpush2.bf16.msra.mxu0 0
    %1072 = vmatprep.mubr.bf16.mxu0 0
    %1073 = vmatmul.mubr.bf16.gmra.mxu0 %v971
    %v1074 = vpop.f32.mrf.mxu0
    %v1075 = vadd.f32 %v991, %v1074
    %v1076 = vpop.f32.mrf.mxu0
    %v1077 = vpop.f32.mrf.mxu0
    %v1078 = vadd.f32 %v991, %v1077
    %v1079 = vpop.f32.mrf.mxu0
    %1080 = vdwg.mxu0
    %v1081 = vld [vmem:[#allocation5] sm:$0xff]
    %v1082 = vld [vmem:[#allocation5 + $0x8] sm:$0xff]
    %v1083 = vsub.f32 %v1075, %v1081
    %v1084 = vsub.f32 %v1078, %v1082
    %v1085 = vmul.f32 %v1083, %v1083
    %v1086 = vmul.f32 %v1084, %v1084
    %1087 = vst [vmem:[#allocation17] sm:$0xff] %v1085
    %1088 = vst [vmem:[#allocation17 + $0x8] sm:$0xff] %v1086
    // Predicated region
    $region74: #{tpu_custom_call.1} parent=1 // pred_check
      _
    $region75: #{tpu_custom_call.1} parent=1 // pred_check_branch
      %1090 = sbr.rel (0) target = $region77
    $region76: #{tpu_custom_call.1} parent=1 // pred_region
      %s1092 = ssub.s32 256, 256
      %1093 = vsyncadd [#allocation4], %s1092
      %s1094 = sshll.u32 [#allocation17], 4
      %s1095 = int_to_ptr.vmem [resolvable:$true] %s1094
      %1100 = dma.vmem_to_hbm [thread:$0]  %s1095, 256, %s9, [#allocation4], 128, 128, 8
    $region77: #{tpu_custom_call.1} parent=1 // pred_fallthru
      _
    // Predicated region
    $region78: #{tpu_custom_call.1} parent=1 // pred_check
      _
    $region79: #{tpu_custom_call.1} parent=1 // pred_check_branch
      %1102 = sbr.rel (0) target = $region81
    $region80: #{tpu_custom_call.1} parent=1 // pred_region
      %1103 = dma.done [#allocation4], 256
    $region81: #{tpu_custom_call.1} parent=1 // pred_fallthru
      _
    %1104 = vsyncpa [#allocation3], 1
    %1105 = vsyncpa [#allocation6], 1
    %1106 = vsyncpa [#allocation9], 1
    %1107 = vsyncpa [#allocation12], 1
    %1108 = vsyncpa [#allocation15], 1
    %1109 = vsyncpa [#allocation4], 1

</llo_original>
